<compile_context>
chip_gen: v6e
topology: v6e:2x2x1
jax: 0.10.0
libtpu: 0.0.40
codegen_flags: <defaults>
</compile_context>

<pallas_src>
import jax
import jax.numpy as jnp
from jax.experimental import pallas as pl
from jax.experimental.pallas import tpu as pltpu


LANE = 128      # lane width: padded hidden dims are multiples of this
SUBLANE = 8     # f32 sublane height: batch tile is a multiple of this


def _round_up(x: int, m: int) -> int:
    return (x + m - 1) // m * m


def _has_two_tensorcores() -> bool:
    """True on v7x-class chips (2 TensorCores, 64 MiB VMEM per core)."""
    try:
        return "v7" in jax.devices()[0].device_kind.lower()
    except Exception:
        return False


def _vmem_budget_bytes(two_cores: bool) -> int:
    """~75% of per-core physical VMEM (generation-aware, conservative fallback)."""
    try:
        cap = int(pltpu.get_tpu_info().vmem_capacity_bytes)
    except Exception:
        cap = (64 if two_cores else 128) * 1024 * 1024
    if two_cores:
        cap = min(cap, 64 * 1024 * 1024)   # v7x per-TC physical VMEM
    return cap * 3 // 4


def _select_block_b(B, in_dim, l1_p, l2_p, out_dim,
                    in_bytes, out_bytes, w_bytes, vmem_budget, two_cores):
    """Largest batch tile that fits the VMEM budget.

    Single-TC chips (v5e/v6e): aim for 1024 rows, no forced split (fewer grid
    steps amortize ~0.35 us/step overhead and get closer to HBM roofline).
    v7x: aim for 512 rows and force an even, >=2-step grid so both
    TensorCores get work.
    """
    # Resident (single-buffered) weights + biases.
    weight_bytes = ((in_dim * l1_p + l1_p * l2_p + l2_p * out_dim) * w_bytes
                    + (l1_p + l2_p + out_dim) * 4)
    # Per batch row: double-buffered x / out tiles, f32 h1/h2 plus their
    # compute-dtype copies feeding the next matmul.
    per_row = (2 * in_dim * in_bytes + 2 * out_dim * out_bytes
               + (l1_p + l2_p) * (4 + w_bytes) + out_dim * 4)
    avail = vmem_budget - 2 * weight_bytes       # 2x slack for layout/temps
    max_rows = avail // max(per_row, 1)
    target = 512 if two_cores else 1024
    bb = min(target, max_rows, _round_up(B, SUBLANE))
    bb = max(SUBLANE, (int(bb) // SUBLANE) * SUBLANE)
    if two_cores and B > SUBLANE:
        steps = max(2, pl.cdiv(B, bb))
        steps = steps + (steps % 2)              # even step count for 2 TCs
        bb = max(SUBLANE, _round_up(pl.cdiv(B, steps), SUBLANE))
    return bb


def prepare_params(params, compute_dtype=jnp.bfloat16):
    """One-time pad + cast of the MLP parameters (call once, reuse per forward).

    Input weights are (fan_in, fan_out) == PyTorch nn.Linear weight transposed.
    Hidden dims are zero-padded to multiples of 128 (lane-dense intermediates);
    zero padding is exact through matmul/bias/ReLU.  Biases stay f32 (bias add
    and ReLU run in f32 on the VPU — v5e has no bf16 VPU).
    """
    w1, b1 = params["w1"], params["b1"]
    w2, b2 = params["w2"], params["b2"]
    w3, b3 = params["w3"], params["b3"]
    in_dim, l1 = w1.shape
    l2, out_dim = w2.shape[1], w3.shape[1]
    l1_p, l2_p = _round_up(l1, LANE), _round_up(l2, LANE)

    def pad_w(w, rows, cols):
        out = jnp.zeros((rows, cols), compute_dtype)
        return out.at[:w.shape[0], :w.shape[1]].set(w.astype(compute_dtype))

    def pad_b(b, cols):
        out = jnp.zeros((1, cols), jnp.float32)
        return out.at[0, :b.shape[0]].set(b.astype(jnp.float32))

    return {
        "w1": pad_w(w1, in_dim, l1_p), "b1": pad_b(b1, l1_p),
        "w2": pad_w(w2, l1_p, l2_p),   "b2": pad_b(b2, l2_p),
        "w3": pad_w(w3, l2_p, out_dim), "b3": pad_b(b3, out_dim),
    }


def mlp_kernel(x_ref, w1_ref, b1_ref, w2_ref, b2_ref, w3_ref, b3_ref, o_ref):
    """Fused 3-layer MLP over one batch tile.

    x_ref : (TB, in_dim)      f32 VMEM (cast to compute dtype in-kernel)
    wN_ref: padded weights    compute dtype (bf16 or f32) VMEM
    bN_ref: (1, dN_out)       f32 VMEM (broadcast over batch)
    o_ref : (TB, out_dim)     out dtype VMEM (unpadded last dim)

    Matmuls run on the MXU with f32 accumulation; bias add + ReLU run in f32
    on the VPU; intermediates are re-cast only to feed the next matmul.
    """
    cdt = w1_ref.dtype
    h1 = jnp.dot(x_ref[...].astype(cdt), w1_ref[...],
                 preferred_element_type=jnp.float32)
    h1 = jnp.maximum(h1 + b1_ref[...], 0.0)

    h2 = jnp.dot(h1.astype(cdt), w2_ref[...],
                 preferred_element_type=jnp.float32)
    h2 = jnp.maximum(h2 + b2_ref[...], 0.0)

    y = jnp.dot(h2.astype(cdt), w3_ref[...],
                preferred_element_type=jnp.float32)
    o_ref[...] = (y + b3_ref[...]).astype(o_ref.dtype)


def mlp_forward(x, prepared, *, block_b=None, out_dtype=None):
    """Run the fused MLP Pallas kernel.

    x: (B, in_dim) float32 — passed to the kernel as-is (no wrapper pad/cast).
    prepared: output of prepare_params().
    """
    B, in_dim = x.shape
    w1, b1 = prepared["w1"], prepared["b1"]
    w2, b2 = prepared["w2"], prepared["b2"]
    w3, b3 = prepared["w3"], prepared["b3"]
    assert w1.shape[0] == in_dim, "x feature dim must match prepared params"
    l1_p, l2_p, out_dim = w1.shape[1], w2.shape[1], w3.shape[1]

    out_dtype = x.dtype if out_dtype is None else out_dtype
    in_bytes = jnp.dtype(x.dtype).itemsize
    out_bytes = jnp.dtype(out_dtype).itemsize
    w_bytes = jnp.dtype(w1.dtype).itemsize

    two_cores = _has_two_tensorcores()
    vmem_budget = _vmem_budget_bytes(two_cores)

    if block_b is None:
        block_b = _select_block_b(B, in_dim, l1_p, l2_p, out_dim,
                                  in_bytes, out_bytes, w_bytes,
                                  vmem_budget, two_cores)
    block_b = max(SUBLANE, _round_up(int(block_b), SUBLANE))

    # Row-pad only when the batch is ragged w.r.t. the tile (zero-cost when
    # B divides block_b); padded rows are sliced off below.
    B_pad = _round_up(B, block_b)
    xp = x if B_pad == B else jnp.pad(x, ((0, B_pad - B), (0, 0)))
    grid = (B_pad // block_b,)

    def _call(single_buffer_weights: bool):
        # Grid-invariant weights/biases: request single buffering so resident
        # parameters are not pointlessly double-buffered (matters on v7x).
        w_kw = ({"pipeline_mode": pl.Buffered(buffer_count=1)}
                if single_buffer_weights else {})
        grid_spec = pl.GridSpec(
            grid=grid,
            in_specs=[
                pl.BlockSpec((block_b, in_dim), lambda i: (i, 0)),
                pl.BlockSpec(w1.shape, lambda i: (0, 0), **w_kw),
                pl.BlockSpec(b1.shape, lambda i: (0, 0), **w_kw),
                pl.BlockSpec(w2.shape, lambda i: (0, 0), **w_kw),
                pl.BlockSpec(b2.shape, lambda i: (0, 0), **w_kw),
                pl.BlockSpec(w3.shape, lambda i: (0, 0), **w_kw),
                pl.BlockSpec(b3.shape, lambda i: (0, 0), **w_kw),
            ],
            out_specs=pl.BlockSpec((block_b, out_dim), lambda i: (i, 0)),
        )
        return pl.pallas_call(
            mlp_kernel,
            out_shape=jax.ShapeDtypeStruct((B_pad, out_dim), out_dtype),
            grid_spec=grid_spec,
            compiler_params=pltpu.CompilerParams(
                dimension_semantics=("parallel",),
                vmem_limit_bytes=int(vmem_budget),
            ),
        )(xp, w1, b1, w2, b2, w3, b3)

    try:
        y = _call(True)
    except Exception as e:
        # Narrow retry: only fall back to default (double) buffering when the
        # error is actually about the Buffered/pipeline_mode feature.  Real
        # failures (e.g. VMEM over budget) are re-raised, never retried with a
        # configuration that needs MORE VMEM.
        msg = str(e).lower()
        if not any(k in msg for k in ("buffered", "pipeline_mode", "buffer_count")):
            raise
        y = _call(False)

    return y if B_pad == B else y[:B]


def init_mlp_params(key, in_dim, lin_1_dim, lin_2_dim, out_dim, dtype=jnp.float32):
    """Deterministic init mimicking nn.Linear's uniform(-1/sqrt(fan_in), +)."""
    ks = jax.random.split(key, 6)

    def lin(kw, kb, fan_in, fan_out):
        bound = 1.0 / jnp.sqrt(fan_in)
        # stored as (fan_in, fan_out) == PyTorch weight transposed
        w = jax.random.uniform(kw, (fan_in, fan_out), dtype, -bound, bound)
        b = jax.random.uniform(kb, (fan_out,), dtype, -bound, bound)
        return w, b

    w1, b1 = lin(ks[0], ks[1], in_dim, lin_1_dim)
    w2, b2 = lin(ks[2], ks[3], lin_1_dim, lin_2_dim)
    w3, b3 = lin(ks[4], ks[5], lin_2_dim, out_dim)
    return {"w1": w1, "b1": b1, "w2": w2, "b2": b2, "w3": w3, "b3": b3}


def mlp_reference_f32(x, p):
    h1 = jnp.maximum(x @ p["w1"] + p["b1"], 0.0)
    h2 = jnp.maximum(h1 @ p["w2"] + p["b2"], 0.0)
    return h2 @ p["w3"] + p["b3"]


def mlp_reference_bf16(x, p):
    """Mirrors the kernel's bf16-MXU / f32-accumulate numerics."""
    bf, f32 = jnp.bfloat16, jnp.float32
    h1 = jnp.dot(x.astype(bf), p["w1"].astype(bf), preferred_element_type=f32)
    h1 = jnp.maximum(h1 + p["b1"].astype(f32), 0.0)
    h2 = jnp.dot(h1.astype(bf), p["w2"].astype(bf), preferred_element_type=f32)
    h2 = jnp.maximum(h2 + p["b2"].astype(f32), 0.0)
    y = jnp.dot(h2.astype(bf), p["w3"].astype(bf), preferred_element_type=f32)
    return y + p["b3"].astype(f32)


if __name__ == "__main__":
    # Small shapes consistent with the module's forward: data is (batch, in_dim).
    # B=50 exercises the ragged-batch row-pad path; hidden dims 64/48 exercise
    # the 128-lane padding of the weights done once in prepare_params.
    B, IN_DIM, L1, L2, OUT_DIM = 50, 32, 64, 48, 16

    key = jax.random.PRNGKey(0)
    kx, kp = jax.random.split(key)
    x = jax.random.normal(kx, (B, IN_DIM), jnp.float32)
    params = init_mlp_params(kp, IN_DIM, L1, L2, OUT_DIM)

    y_f32_ref = mlp_reference_f32(x, params)
    y_bf16_ref = mlp_reference_bf16(x, params)

    # Default path: bf16 MXU inputs with f32 accumulation (fast).
    prepared_bf16 = prepare_params(params, jnp.bfloat16)
    y = jax.block_until_ready(mlp_forward(x, prepared_bf16))
    assert y.shape == (B, OUT_DIM)
    assert y.dtype == x.dtype
    assert jnp.allclose(y, y_bf16_ref, atol=1e-2, rtol=1e-2), "mismatch vs bf16 reference"
    assert jnp.allclose(y, y_f32_ref, atol=6e-2, rtol=6e-2), "mismatch vs f32 reference"

    # Fidelity path: full f32 compute (closer to PyTorch f32 Linear semantics).
    prepared_f32 = prepare_params(params, jnp.float32)
    y32 = jax.block_until_ready(mlp_forward(x, prepared_f32))
    assert y32.shape == (B, OUT_DIM)
    assert jnp.allclose(y32, y_f32_ref, atol=2e-2, rtol=2e-2), "mismatch vs f32 reference (f32 path)"

    print("KERNEL_OK")
</pallas_src>

<mosaic_0001>
module attributes {stable_mosaic.version = 11 : i64} {
  func.func @mlp_kernel(%arg0: i32, %arg1: memref<56x32xf32, #tpu.memory_space<vmem>>, %arg2: memref<32x128xbf16, #tpu.memory_space<vmem>>, %arg3: memref<1x128xf32, #tpu.memory_space<vmem>>, %arg4: memref<128x128xbf16, #tpu.memory_space<vmem>>, %arg5: memref<1x128xf32, #tpu.memory_space<vmem>>, %arg6: memref<128x16xbf16, #tpu.memory_space<vmem>>, %arg7: memref<1x16xf32, #tpu.memory_space<vmem>>, %arg8: memref<56x16xf32, #tpu.memory_space<vmem>>) attributes {dimension_semantics = [#tpu.dimension_semantics<parallel>], iteration_bounds = array<i64: 1>, scalar_prefetch = 0 : i64, scratch_operands = 0 : i64, tpu.core_type = #tpu.core_type<tc>, window_params = [{transform_indices = @transform_0, window_bounds = array<i64: 56, 32>}, {pipeline_mode = #tpu.pipeline_mode<synchronous>, transform_indices = @transform_1, window_bounds = array<i64: 32, 128>}, {pipeline_mode = #tpu.pipeline_mode<synchronous>, transform_indices = @transform_2, window_bounds = array<i64: 1, 128>}, {pipeline_mode = #tpu.pipeline_mode<synchronous>, transform_indices = @transform_3, window_bounds = array<i64: 128, 128>}, {pipeline_mode = #tpu.pipeline_mode<synchronous>, transform_indices = @transform_4, window_bounds = array<i64: 1, 128>}, {pipeline_mode = #tpu.pipeline_mode<synchronous>, transform_indices = @transform_5, window_bounds = array<i64: 128, 16>}, {pipeline_mode = #tpu.pipeline_mode<synchronous>, transform_indices = @transform_6, window_bounds = array<i64: 1, 16>}, {transform_indices = @transform_7, window_bounds = array<i64: 56, 16>}]} {
    %c0 = arith.constant 0 : index
    %c0_0 = arith.constant 0 : index
    %0 = vector.load %arg1[%c0, %c0_0] : memref<56x32xf32, #tpu.memory_space<vmem>>, vector<56x32xf32>
    %1 = arith.truncf %0 : vector<56x32xf32> to vector<56x32xbf16>
    %c0_1 = arith.constant 0 : index
    %c0_2 = arith.constant 0 : index
    %2 = vector.load %arg2[%c0_1, %c0_2] : memref<32x128xbf16, #tpu.memory_space<vmem>>, vector<32x128xbf16>
    %cst = arith.constant dense<0.000000e+00> : vector<56x128xf32>
    %3 = tpu.matmul %1, %2, %cst {dimension_numbers = #tpu.dot_dimension_numbers<[1], [0], [0], [1], [0, 0, 1, 1], [], []>} : vector<56x32xbf16>, vector<32x128xbf16>, vector<56x128xf32> -> vector<56x128xf32>
    %c0_3 = arith.constant 0 : index
    %c0_4 = arith.constant 0 : index
    %4 = vector.load %arg3[%c0_3, %c0_4] : memref<1x128xf32, #tpu.memory_space<vmem>>, vector<1x128xf32>
    %5 = vector.broadcast %4 : vector<1x128xf32> to vector<56x128xf32>
    %6 = arith.addf %3, %5 : vector<56x128xf32>
    %cst_5 = arith.constant 0.000000e+00 : f32
    %7 = vector.broadcast %cst_5 : f32 to vector<56x128xf32>
    %8 = arith.maximumf %6, %7 : vector<56x128xf32>
    %9 = arith.truncf %8 : vector<56x128xf32> to vector<56x128xbf16>
    %c0_6 = arith.constant 0 : index
    %c0_7 = arith.constant 0 : index
    %10 = vector.load %arg4[%c0_6, %c0_7] : memref<128x128xbf16, #tpu.memory_space<vmem>>, vector<128x128xbf16>
    %cst_8 = arith.constant dense<0.000000e+00> : vector<56x128xf32>
    %11 = tpu.matmul %9, %10, %cst_8 {dimension_numbers = #tpu.dot_dimension_numbers<[1], [0], [0], [1], [0, 0, 1, 1], [], []>} : vector<56x128xbf16>, vector<128x128xbf16>, vector<56x128xf32> -> vector<56x128xf32>
    %c0_9 = arith.constant 0 : index
    %c0_10 = arith.constant 0 : index
    %12 = vector.load %arg5[%c0_9, %c0_10] : memref<1x128xf32, #tpu.memory_space<vmem>>, vector<1x128xf32>
    %13 = vector.broadcast %12 : vector<1x128xf32> to vector<56x128xf32>
    %14 = arith.addf %11, %13 : vector<56x128xf32>
    %cst_11 = arith.constant 0.000000e+00 : f32
    %15 = vector.broadcast %cst_11 : f32 to vector<56x128xf32>
    %16 = arith.maximumf %14, %15 : vector<56x128xf32>
    %17 = arith.truncf %16 : vector<56x128xf32> to vector<56x128xbf16>
    %c0_12 = arith.constant 0 : index
    %c0_13 = arith.constant 0 : index
    %18 = vector.load %arg6[%c0_12, %c0_13] : memref<128x16xbf16, #tpu.memory_space<vmem>>, vector<128x16xbf16>
    %cst_14 = arith.constant dense<0.000000e+00> : vector<56x16xf32>
    %19 = tpu.matmul %17, %18, %cst_14 {dimension_numbers = #tpu.dot_dimension_numbers<[1], [0], [0], [1], [0, 0, 1, 1], [], []>} : vector<56x128xbf16>, vector<128x16xbf16>, vector<56x16xf32> -> vector<56x16xf32>
    %c0_15 = arith.constant 0 : index
    %c0_16 = arith.constant 0 : index
    %20 = vector.load %arg7[%c0_15, %c0_16] : memref<1x16xf32, #tpu.memory_space<vmem>>, vector<1x16xf32>
    %21 = vector.broadcast %20 : vector<1x16xf32> to vector<56x16xf32>
    %22 = arith.addf %19, %21 : vector<56x16xf32>
    %c0_17 = arith.constant 0 : index
    %c0_18 = arith.constant 0 : index
    %23 = vector.load %arg8[%c0_17, %c0_18] : memref<56x16xf32, #tpu.memory_space<vmem>>, vector<56x16xf32>
    tpu.vector_store %arg8[%c0_17, %c0_18], %22 {strides = array<i32>} : memref<56x16xf32, #tpu.memory_space<vmem>>, vector<56x16xf32>,
    return
  }
  func.func @transform_0(%arg0: i32) -> (i32, i32) {
    %c0_i32 = arith.constant 0 : i32
    %c0_i32_0 = arith.constant 0 : i32
    return %arg0, %c0_i32 : i32, i32
  }
  func.func @transform_1(%arg0: i32) -> (i32, i32) {
    %c0_i32 = arith.constant 0 : i32
    %c0_i32_0 = arith.constant 0 : i32
    %c0_i32_1 = arith.constant 0 : i32
    return %c0_i32, %c0_i32_0 : i32, i32
  }
  func.func @transform_2(%arg0: i32) -> (i32, i32) {
    %c0_i32 = arith.constant 0 : i32
    %c0_i32_0 = arith.constant 0 : i32
    %c0_i32_1 = arith.constant 0 : i32
    return %c0_i32, %c0_i32_0 : i32, i32
  }
  func.func @transform_3(%arg0: i32) -> (i32, i32) {
    %c0_i32 = arith.constant 0 : i32
    %c0_i32_0 = arith.constant 0 : i32
    %c0_i32_1 = arith.constant 0 : i32
    return %c0_i32, %c0_i32_0 : i32, i32
  }
  func.func @transform_4(%arg0: i32) -> (i32, i32) {
    %c0_i32 = arith.constant 0 : i32
    %c0_i32_0 = arith.constant 0 : i32
    %c0_i32_1 = arith.constant 0 : i32
    return %c0_i32, %c0_i32_0 : i32, i32
  }
  func.func @transform_5(%arg0: i32) -> (i32, i32) {
    %c0_i32 = arith.constant 0 : i32
    %c0_i32_0 = arith.constant 0 : i32
    %c0_i32_1 = arith.constant 0 : i32
    return %c0_i32, %c0_i32_0 : i32, i32
  }
  func.func @transform_6(%arg0: i32) -> (i32, i32) {
    %c0_i32 = arith.constant 0 : i32
    %c0_i32_0 = arith.constant 0 : i32
    %c0_i32_1 = arith.constant 0 : i32
    return %c0_i32, %c0_i32_0 : i32, i32
  }
  func.func @transform_7(%arg0: i32) -> (i32, i32) {
    %c0_i32 = arith.constant 0 : i32
    %c0_i32_0 = arith.constant 0 : i32
    return %arg0, %c0_i32 : i32, i32
  }
}

</mosaic_0001>

<llo_original>
// kernel: tpu_custom_call.1
$region0: #{tpu_custom_call.1}
  #allocation0 [shape = 'u32[]', space=smem, size = 0x4, offset = 0x4, fixed_abs, tag = 'smem constant byte address 0x4 - core index']
  #allocation1 [shape = 'u32[144,128]{1,0:T(1,128)}', space=vmem, size = 0x12000, scoped, tag = 'internal scratch']
  %s0 = inlined_call_operand.vmem [shape: f32[56,32], index: 0, kind: input, shape index: {}]
  %s1 = inlined_call_operand.vmem [shape: bf16[32,128], index: 1, kind: input, shape index: {}]
  %s2 = inlined_call_operand.vmem [shape: f32[1,128], index: 2, kind: input, shape index: {}]
  %s3 = inlined_call_operand.vmem [shape: bf16[128,128], index: 3, kind: input, shape index: {}]
  %s4 = inlined_call_operand.vmem [shape: f32[1,128], index: 4, kind: input, shape index: {}]
  %s5 = inlined_call_operand.vmem [shape: bf16[128,16], index: 5, kind: input, shape index: {}]
  %s6 = inlined_call_operand.vmem [shape: f32[1,16], index: 6, kind: input, shape index: {}]
  %s7 = inlined_call_operand.vmem [shape: f32[56,16], index: 7, kind: output, shape index: {}]
  %s8 = sld [smem:[#allocation0]]
  $region38: #{tpu_custom_call.1} parent=0
    _
  %s10 = ssub.s32 1, %s8
  %s11 = scalar_select 0, %s10, %s8
  // Predicated region
  $region2: #{tpu_custom_call.1} parent=0 // pred_check
    _
  $region3: #{tpu_custom_call.1} parent=0 // pred_check_branch
    %13 = sbr.rel (0) target = $region5
  $region4: #{tpu_custom_call.1} parent=0 // pred_region
    _
  $region5: #{tpu_custom_call.1} parent=0 // pred_fallthru
    _
  // Predicated region
  $region6: #{tpu_custom_call.1} parent=0 // pred_check
    _
  $region7: #{tpu_custom_call.1} parent=0 // pred_check_branch
    %15 = sbr.rel (0) target = $region9
  $region8: #{tpu_custom_call.1} parent=0 // pred_region
    _
  $region9: #{tpu_custom_call.1} parent=0 // pred_fallthru
    _
  // Predicated region
  $region10: #{tpu_custom_call.1} parent=0 // pred_check
    _
  $region11: #{tpu_custom_call.1} parent=0 // pred_check_branch
    %17 = sbr.rel (0) target = $region13
  $region12: #{tpu_custom_call.1} parent=0 // pred_region
    _
  $region13: #{tpu_custom_call.1} parent=0 // pred_fallthru
    _
  // Predicated region
  $region14: #{tpu_custom_call.1} parent=0 // pred_check
    _
  $region15: #{tpu_custom_call.1} parent=0 // pred_check_branch
    %19 = sbr.rel (0) target = $region17
  $region16: #{tpu_custom_call.1} parent=0 // pred_region
    _
  $region17: #{tpu_custom_call.1} parent=0 // pred_fallthru
    _
  // Predicated region
  $region18: #{tpu_custom_call.1} parent=0 // pred_check
    _
  $region19: #{tpu_custom_call.1} parent=0 // pred_check_branch
    %21 = sbr.rel (0) target = $region21
  $region20: #{tpu_custom_call.1} parent=0 // pred_region
    _
  $region21: #{tpu_custom_call.1} parent=0 // pred_fallthru
    _
  // Predicated region
  $region22: #{tpu_custom_call.1} parent=0 // pred_check
    _
  $region23: #{tpu_custom_call.1} parent=0 // pred_check_branch
    %23 = sbr.rel (0) target = $region25
  $region24: #{tpu_custom_call.1} parent=0 // pred_region
    _
  $region25: #{tpu_custom_call.1} parent=0 // pred_fallthru
    _
  // Predicated region
  $region26: #{tpu_custom_call.1} parent=0 // pred_check
    _
  $region27: #{tpu_custom_call.1} parent=0 // pred_check_branch
    %25 = sbr.rel (0) target = $region29
  $region28: #{tpu_custom_call.1} parent=0 // pred_region
    _
  $region29: #{tpu_custom_call.1} parent=0 // pred_fallthru
    _
  %v27 = vld [vmem:[%s0] sm:$0xff]
  %v28 = vld [vmem:[%s0 + $0x8] sm:$0xff]
  %v29 = vld [vmem:[%s0 + $0x10] sm:$0xff]
  %v30 = vld [vmem:[%s0 + $0x18] sm:$0xff]
  %v31 = vld [vmem:[%s0 + $0x20] sm:$0xff]
  %v32 = vld [vmem:[%s0 + $0x28] sm:$0xff]
  %v33 = vld [vmem:[%s0 + $0x30] sm:$0xff]
  %v34 = vpack.c.bf16 %v28, %v27
  %v35 = vpack.c.bf16 %v30, %v29
  %v36 = vpack.c.bf16 %v32, %v31
  %v37 = vpack.c.bf16 %v33, %v33
  %v38 = vld [vmem:[%s1] sm:$0xf]
  %v39 = vld [vmem:[%s1 + $0x4] sm:$0xf]
  %v40 = vld [vmem:[%s1 + $0x8] sm:$0xf]
  %v41 = vld [vmem:[%s1 + $0xc] sm:$0xf]
  %v42 = vld [vmem:[%s2] sm:$0x1]
  %v44 = vlaneseq
  %v45 = vshrl.u32 %v44, 7
  %v46 = vsub.s32 0, %v45
  %v47 = vrot.slane %v42, %v46
  %v53 = vunpack.c.l.b16 %v38
  %v54 = vunpack.c.l.b16 %v39
  %v55 = vunpack.c.l.b16 %v40
  %v56 = vunpack.c.l.b16 %v41
  %v57 = vpack.c.b16 %v54, %v53
  %v58 = vpack.c.b16 %v56, %v55
  %vm61 = vcmask 261120
  %v63 = vsel %vm61, %v34, 0
  %v66 = vsel %vm61, %v35, 0
  %v69 = vsel %vm61, %v36, 0
  %v72 = vsel %vm61, %v37, 0
  %74 = vmatprep.subr.bf16.mxu0 0
  %75 = vmatpush1.bf16.msra.mxu0 0
  %76 = vmatprep.subr.bf16.mxu0 0
  %77 = vmatpush1.bf16.msra.mxu0 0
  %78 = vmatprep.subr.bf16.mxu0 0
  %79 = vmatpush1.bf16.msra.mxu0 0
  %80 = vmatprep.subr.bf16.mxu0 0
  %81 = vmatpush1.bf16.msra.mxu0 0
  %82 = vmatprep.subr.bf16.mxu0 0
  %83 = vmatpush1.bf16.msra.mxu0 0
  %84 = vmatprep.subr.bf16.mxu0 0
  %85 = vmatpush1.bf16.msra.mxu0 0
  %86 = vmatprep.subr.bf16.mxu0 0
  %87 = vmatpush1.bf16.msra.mxu0 %v58
  %88 = vmatprep.subr.bf16.mxu0 0
  %89 = vmatpush1.bf16.msra.mxu0 %v57
  %90 = vmatprep.subr.bf16.mxu0 0
  %91 = vmatpush2.bf16.msra.mxu0 0
  %92 = vmatprep.subr.bf16.mxu0 0
  %93 = vmatpush2.bf16.msra.mxu0 0
  %94 = vmatprep.subr.bf16.mxu0 0
  %95 = vmatpush2.bf16.msra.mxu0 0
  %96 = vmatprep.subr.bf16.mxu0 0
  %97 = vmatpush2.bf16.msra.mxu0 0
  %98 = vmatprep.subr.bf16.mxu0 0
  %99 = vmatpush2.bf16.msra.mxu0 0
  %100 = vmatprep.subr.bf16.mxu0 0
  %101 = vmatpush2.bf16.msra.mxu0 0
  %102 = vmatprep.subr.bf16.mxu0 0
  %103 = vmatpush2.bf16.msra.mxu0 0
  %104 = vmatprep.subr.bf16.mxu0 0
  %105 = vmatpush2.bf16.msra.mxu0 0
  %106 = vmatprep.mubr.bf16.mxu0 0
  %107 = vmatmul.mubr.bf16.gmra.mxu0 %v63
  %v108 = vpop.f32.mrf.mxu0
  %v109 = vadd.f32 %v47, %v108
  %v110 = vpop.f32.mrf.mxu0
  %v111 = vpop.f32.mrf.mxu0
  %v112 = vadd.f32 %v47, %v111
  %v113 = vpop.f32.mrf.mxu0
  %114 = vmatprep.mubr.bf16.mxu0 0
  %115 = vmatmul.mubr.bf16.gmra.mxu0 %v66
  %v116 = vpop.f32.mrf.mxu0
  %v117 = vadd.f32 %v47, %v116
  %v118 = vpop.f32.mrf.mxu0
  %v119 = vpop.f32.mrf.mxu0
  %v120 = vadd.f32 %v47, %v119
  %v121 = vpop.f32.mrf.mxu0
  %122 = vmatprep.mubr.bf16.mxu0 0
  %123 = vmatmul.mubr.bf16.gmra.mxu0 %v69
  %v124 = vpop.f32.mrf.mxu0
  %v125 = vadd.f32 %v47, %v124
  %v126 = vpop.f32.mrf.mxu0
  %v127 = vpop.f32.mrf.mxu0
  %v128 = vadd.f32 %v47, %v127
  %v129 = vpop.f32.mrf.mxu0
  %130 = vmatprep.mubr.bf16.mxu0 0
  %131 = vmatmul.mubr.bf16.gmra.mxu0 %v72
  %v132 = vpop.f32.mrf.mxu0
  %v133 = vadd.f32 %v47, %v132
  %v134 = vpop.f32.mrf.mxu0
  %v135 = vpop.f32.mrf.mxu0
  %v136 = vpop.f32.mrf.mxu0
  %137 = vdwg.mxu0
  %v138 = vmax.f32 %v109, 0.0
  %v139 = vmax.f32 %v112, 0.0
  %v140 = vmax.f32 %v117, 0.0
  %v141 = vmax.f32 %v120, 0.0
  %v142 = vmax.f32 %v125, 0.0
  %v143 = vmax.f32 %v128, 0.0
  %v144 = vmax.f32 %v133, 0.0
  %v145 = vpack.c.bf16 %v139, %v138
  %v146 = vpack.c.bf16 %v141, %v140
  %v147 = vpack.c.bf16 %v143, %v142
  %v148 = vpack.c.bf16 %v144, %v144
  %v149 = vld [vmem:[%s3] sm:$0xf]
  %v150 = vld [vmem:[%s3 + $0x4] sm:$0xf]
  %v151 = vld [vmem:[%s3 + $0x8] sm:$0xf]
  %v152 = vld [vmem:[%s3 + $0xc] sm:$0xf]
  %v153 = vld [vmem:[%s3 + $0x10] sm:$0xf]
  %v154 = vld [vmem:[%s3 + $0x14] sm:$0xf]
  %v155 = vld [vmem:[%s3 + $0x18] sm:$0xf]
  %v156 = vld [vmem:[%s3 + $0x1c] sm:$0xf]
  %v157 = vld [vmem:[%s3 + $0x20] sm:$0xf]
  %v158 = vld [vmem:[%s3 + $0x24] sm:$0xf]
  %v159 = vld [vmem:[%s3 + $0x28] sm:$0xf]
  %v160 = vld [vmem:[%s3 + $0x2c] sm:$0xf]
  %v161 = vld [vmem:[%s3 + $0x30] sm:$0xf]
  %v162 = vld [vmem:[%s3 + $0x34] sm:$0xf]
  %v163 = vld [vmem:[%s3 + $0x38] sm:$0xf]
  %v164 = vld [vmem:[%s3 + $0x3c] sm:$0xf]
  %v165 = vld [vmem:[%s4] sm:$0x1]
  %v167 = vlaneseq
  %v168 = vshrl.u32 %v167, 7
  %v169 = vsub.s32 0, %v168
  %v170 = vrot.slane %v165, %v169
  %v188 = vunpack.c.l.b16 %v149
  %v189 = vunpack.c.l.b16 %v150
  %v190 = vunpack.c.l.b16 %v151
  %v191 = vunpack.c.l.b16 %v152
  %v192 = vunpack.c.l.b16 %v153
  %v193 = vunpack.c.l.b16 %v154
  %v194 = vunpack.c.l.b16 %v155
  %v195 = vunpack.c.l.b16 %v156
  %v196 = vunpack.c.l.b16 %v157
  %v197 = vunpack.c.l.b16 %v158
  %v198 = vunpack.c.l.b16 %v159
  %v199 = vunpack.c.l.b16 %v160
  %v200 = vunpack.c.l.b16 %v161
  %v201 = vunpack.c.l.b16 %v162
  %v202 = vunpack.c.l.b16 %v163
  %v203 = vunpack.c.l.b16 %v164
  %v204 = vpack.c.b16 %v189, %v188
  %v205 = vpack.c.b16 %v191, %v190
  %v206 = vpack.c.b16 %v193, %v192
  %v207 = vpack.c.b16 %v195, %v194
  %v208 = vpack.c.b16 %v197, %v196
  %v209 = vpack.c.b16 %v199, %v198
  %v210 = vpack.c.b16 %v201, %v200
  %v211 = vpack.c.b16 %v203, %v202
  %220 = vmatprep.subr.bf16.mxu0 0
  %221 = vmatpush1.bf16.msra.mxu0 %v211
  %222 = vmatprep.subr.bf16.mxu0 0
  %223 = vmatpush1.bf16.msra.mxu0 %v210
  %224 = vmatprep.subr.bf16.mxu0 0
  %225 = vmatpush1.bf16.msra.mxu0 %v209
  %226 = vmatprep.subr.bf16.mxu0 0
  %227 = vmatpush1.bf16.msra.mxu0 %v208
  %228 = vmatprep.subr.bf16.mxu0 0
  %229 = vmatpush1.bf16.msra.mxu0 %v207
  %230 = vmatprep.subr.bf16.mxu0 0
  %231 = vmatpush1.bf16.msra.mxu0 %v206
  %232 = vmatprep.subr.bf16.mxu0 0
  %233 = vmatpush1.bf16.msra.mxu0 %v205
  %234 = vmatprep.subr.bf16.mxu0 0
  %235 = vmatpush1.bf16.msra.mxu0 %v204
  %236 = vmatprep.subr.bf16.mxu0 0
  %237 = vmatpush2.bf16.msra.mxu0 0
  %238 = vmatprep.subr.bf16.mxu0 0
  %239 = vmatpush2.bf16.msra.mxu0 0
  %240 = vmatprep.subr.bf16.mxu0 0
  %241 = vmatpush2.bf16.msra.mxu0 0
  %242 = vmatprep.subr.bf16.mxu0 0
  %243 = vmatpush2.bf16.msra.mxu0 0
  %244 = vmatprep.subr.bf16.mxu0 0
  %245 = vmatpush2.bf16.msra.mxu0 0
  %246 = vmatprep.subr.bf16.mxu0 0
  %247 = vmatpush2.bf16.msra.mxu0 0
  %248 = vmatprep.subr.bf16.mxu0 0
  %249 = vmatpush2.bf16.msra.mxu0 0
  %250 = vmatprep.subr.bf16.mxu0 0
  %251 = vmatpush2.bf16.msra.mxu0 0
  %252 = vmatprep.mubr.bf16.mxu0 0
  %253 = vmatmul.mubr.bf16.gmra.mxu0 %v145
  %v254 = vpop.f32.mrf.mxu0
  %v255 = vadd.f32 %v170, %v254
  %v256 = vpop.f32.mrf.mxu0
  %v257 = vpop.f32.mrf.mxu0
  %v258 = vadd.f32 %v170, %v257
  %v259 = vpop.f32.mrf.mxu0
  %260 = vmatprep.mubr.bf16.mxu0 0
  %261 = vmatmul.mubr.bf16.gmra.mxu0 %v146
  %v262 = vpop.f32.mrf.mxu0
  %v263 = vadd.f32 %v170, %v262
  %v264 = vpop.f32.mrf.mxu0
  %v265 = vpop.f32.mrf.mxu0
  %v266 = vadd.f32 %v170, %v265
  %v267 = vpop.f32.mrf.mxu0
  %268 = vmatprep.mubr.bf16.mxu0 0
  %269 = vmatmul.mubr.bf16.gmra.mxu0 %v147
  %v270 = vpop.f32.mrf.mxu0
  %v271 = vadd.f32 %v170, %v270
  %v272 = vpop.f32.mrf.mxu0
  %v273 = vpop.f32.mrf.mxu0
  %v274 = vadd.f32 %v170, %v273
  %v275 = vpop.f32.mrf.mxu0
  %276 = vmatprep.mubr.bf16.mxu0 0
  %277 = vmatmul.mubr.bf16.gmra.mxu0 %v148
  %v278 = vpop.f32.mrf.mxu0
  %v279 = vadd.f32 %v170, %v278
  %v280 = vpop.f32.mrf.mxu0
  %v281 = vpop.f32.mrf.mxu0
  %v282 = vpop.f32.mrf.mxu0
  %283 = vdwg.mxu0
  %v284 = vmax.f32 %v255, 0.0
  %v285 = vmax.f32 %v258, 0.0
  %v286 = vmax.f32 %v263, 0.0
  %v287 = vmax.f32 %v266, 0.0
  %v288 = vmax.f32 %v271, 0.0
  %v289 = vmax.f32 %v274, 0.0
  %v290 = vmax.f32 %v279, 0.0
  %v291 = vpack.c.bf16 %v285, %v284
  %v292 = vpack.c.bf16 %v287, %v286
  %v293 = vpack.c.bf16 %v289, %v288
  %v294 = vpack.c.bf16 %v290, %v290
  %v295 = vld [vmem:[%s5] sm:$0xf]
  %v296 = vld [vmem:[%s5 + $0x4] sm:$0xf]
  %v297 = vld [vmem:[%s5 + $0x8] sm:$0xf]
  %v298 = vld [vmem:[%s5 + $0xc] sm:$0xf]
  %v299 = vld [vmem:[%s5 + $0x10] sm:$0xf]
  %v300 = vld [vmem:[%s5 + $0x14] sm:$0xf]
  %v301 = vld [vmem:[%s5 + $0x18] sm:$0xf]
  %v302 = vld [vmem:[%s5 + $0x1c] sm:$0xf]
  %v303 = vld [vmem:[%s5 + $0x20] sm:$0xf]
  %v304 = vld [vmem:[%s5 + $0x24] sm:$0xf]
  %v305 = vld [vmem:[%s5 + $0x28] sm:$0xf]
  %v306 = vld [vmem:[%s5 + $0x2c] sm:$0xf]
  %v307 = vld [vmem:[%s5 + $0x30] sm:$0xf]
  %v308 = vld [vmem:[%s5 + $0x34] sm:$0xf]
  %v309 = vld [vmem:[%s5 + $0x38] sm:$0xf]
  %v310 = vld [vmem:[%s5 + $0x3c] sm:$0xf]
  %v311 = vld [vmem:[%s6] sm:$0x1]
  %v313 = vlaneseq
  %v314 = vshrl.u32 %v313, 7
  %v315 = vsub.s32 0, %v314
  %v316 = vrot.slane %v311, %v315
  %v334 = vunpack.c.l.b16 %v295
  %v335 = vunpack.c.l.b16 %v296
  %v336 = vunpack.c.l.b16 %v297
  %v337 = vunpack.c.l.b16 %v298
  %v338 = vunpack.c.l.b16 %v299
  %v339 = vunpack.c.l.b16 %v300
  %v340 = vunpack.c.l.b16 %v301
  %v341 = vunpack.c.l.b16 %v302
  %v342 = vunpack.c.l.b16 %v303
  %v343 = vunpack.c.l.b16 %v304
  %v344 = vunpack.c.l.b16 %v305
  %v345 = vunpack.c.l.b16 %v306
  %v346 = vunpack.c.l.b16 %v307
  %v347 = vunpack.c.l.b16 %v308
  %v348 = vunpack.c.l.b16 %v309
  %v349 = vunpack.c.l.b16 %v310
  %v350 = vpack.c.b16 %v335, %v334
  %v351 = vpack.c.b16 %v337, %v336
  %v352 = vpack.c.b16 %v339, %v338
  %v353 = vpack.c.b16 %v341, %v340
  %v354 = vpack.c.b16 %v343, %v342
  %v355 = vpack.c.b16 %v345, %v344
  %v356 = vpack.c.b16 %v347, %v346
  %v357 = vpack.c.b16 %v349, %v348
  %366 = vmatprep.subr.bf16.mxu0 0
  %367 = vmatpush1.bf16.msra.mxu0 %v357
  %368 = vmatprep.subr.bf16.mxu0 0
  %369 = vmatpush1.bf16.msra.mxu0 %v356
  %370 = vmatprep.subr.bf16.mxu0 0
  %371 = vmatpush1.bf16.msra.mxu0 %v355
  %372 = vmatprep.subr.bf16.mxu0 0
  %373 = vmatpush1.bf16.msra.mxu0 %v354
  %374 = vmatprep.subr.bf16.mxu0 0
  %375 = vmatpush1.bf16.msra.mxu0 %v353
  %376 = vmatprep.subr.bf16.mxu0 0
  %377 = vmatpush1.bf16.msra.mxu0 %v352
  %378 = vmatprep.subr.bf16.mxu0 0
  %379 = vmatpush1.bf16.msra.mxu0 %v351
  %380 = vmatprep.subr.bf16.mxu0 0
  %381 = vmatpush1.bf16.msra.mxu0 %v350
  %382 = vmatprep.subr.bf16.mxu0 0
  %383 = vmatpush2.bf16.msra.mxu0 0
  %384 = vmatprep.subr.bf16.mxu0 0
  %385 = vmatpush2.bf16.msra.mxu0 0
  %386 = vmatprep.subr.bf16.mxu0 0
  %387 = vmatpush2.bf16.msra.mxu0 0
  %388 = vmatprep.subr.bf16.mxu0 0
  %389 = vmatpush2.bf16.msra.mxu0 0
  %390 = vmatprep.subr.bf16.mxu0 0
  %391 = vmatpush2.bf16.msra.mxu0 0
  %392 = vmatprep.subr.bf16.mxu0 0
  %393 = vmatpush2.bf16.msra.mxu0 0
  %394 = vmatprep.subr.bf16.mxu0 0
  %395 = vmatpush2.bf16.msra.mxu0 0
  %396 = vmatprep.subr.bf16.mxu0 0
  %397 = vmatpush2.bf16.msra.mxu0 0
  %398 = vmatprep.mubr.bf16.mxu0 0
  %399 = vmatmul.mubr.bf16.gmra.mxu0 %v291
  %v400 = vpop.f32.mrf.mxu0
  %v401 = vadd.f32 %v316, %v400
  %v402 = vpop.f32.mrf.mxu0
  %v403 = vpop.f32.mrf.mxu0
  %v404 = vadd.f32 %v316, %v403
  %v405 = vpop.f32.mrf.mxu0
  %406 = vmatprep.mubr.bf16.mxu0 0
  %407 = vmatmul.mubr.bf16.gmra.mxu0 %v292
  %v408 = vpop.f32.mrf.mxu0
  %v409 = vadd.f32 %v316, %v408
  %v410 = vpop.f32.mrf.mxu0
  %v411 = vpop.f32.mrf.mxu0
  %v412 = vadd.f32 %v316, %v411
  %v413 = vpop.f32.mrf.mxu0
  %414 = vmatprep.mubr.bf16.mxu0 0
  %415 = vmatmul.mubr.bf16.gmra.mxu0 %v293
  %v416 = vpop.f32.mrf.mxu0
  %v417 = vadd.f32 %v316, %v416
  %v418 = vpop.f32.mrf.mxu0
  %v419 = vpop.f32.mrf.mxu0
  %v420 = vadd.f32 %v316, %v419
  %v421 = vpop.f32.mrf.mxu0
  %422 = vmatprep.mubr.bf16.mxu0 0
  %423 = vmatmul.mubr.bf16.gmra.mxu0 %v294
  %v424 = vpop.f32.mrf.mxu0
  %v425 = vadd.f32 %v316, %v424
  %v426 = vpop.f32.mrf.mxu0
  %v427 = vpop.f32.mrf.mxu0
  %v428 = vpop.f32.mrf.mxu0
  %429 = vdwg.mxu0
  %vm430 = vcmask 130048
  %431 = vst.msk [vmem:[%s7] sm:$0xff] %vm430, %v401
  %432 = vst.msk [vmem:[%s7 + $0x8] sm:$0xff] %vm430, %v404
  %433 = vst.msk [vmem:[%s7 + $0x10] sm:$0xff] %vm430, %v409
  %434 = vst.msk [vmem:[%s7 + $0x18] sm:$0xff] %vm430, %v412
  %435 = vst.msk [vmem:[%s7 + $0x20] sm:$0xff] %vm430, %v417
  %436 = vst.msk [vmem:[%s7 + $0x28] sm:$0xff] %vm430, %v420
  %437 = vst.msk [vmem:[%s7 + $0x30] sm:$0xff] %vm430, %v425
  // Predicated region
  $region30: #{tpu_custom_call.1} parent=0 // pred_check
    _
  $region31: #{tpu_custom_call.1} parent=0 // pred_check_branch
    %439 = sbr.rel (0) target = $region33
  $region32: #{tpu_custom_call.1} parent=0 // pred_region
    _
  $region33: #{tpu_custom_call.1} parent=0 // pred_fallthru
    _
  // Predicated region
  $region34: #{tpu_custom_call.1} parent=0 // pred_check
    _
  $region35: #{tpu_custom_call.1} parent=0 // pred_check_branch
    %441 = sbr.rel (0) target = $region37
  $region36: #{tpu_custom_call.1} parent=0 // pred_region
    _
  $region37: #{tpu_custom_call.1} parent=0 // pred_fallthru
    _

</llo_original>
